<compile_context>
chip_gen: v6e
topology: v6e:2x2x1
jax: 0.10.0
libtpu: 0.0.40
codegen_flags: <defaults>
</compile_context>

<pallas_src>
import jax
import jax.numpy as jnp
from jax.experimental import pallas as pl
from jax.experimental.pallas import tpu as pltpu

IN_C, OUT_C, KH, KW = 3, 6, 3, 3      # Conv2d(3, 6, kernel_size=3, stride=1, padding=0)
K_TAPS = IN_C * KH * KW               # 27 contraction terms
KP = 32                               # sublane-padded contraction dim (27 -> 32)
OP = 8                                # sublane-padded output channels (6 -> 8)


def _conv_matmul_kernel(p_ref, w_ref, b_ref, o_ref):
    # p_ref: (KP, N*HW)  im2col patches (rows 27..31 zero), lane idx = n*HW + hw
    # w_ref: (OP, KP)    weight matrix (zero padded)
    # b_ref: (OP, 1)     bias column (zero padded)
    # o_ref: (OP, N*HW)  dense lane-wide output
    acc = jnp.dot(w_ref[...], p_ref[...], preferred_element_type=jnp.float32)
    acc = acc + jnp.broadcast_to(b_ref[...], acc.shape)
    o_ref[...] = acc.astype(o_ref.dtype)


@jax.jit
def tudui_forward(x_nchw, w_ochw, b_o):
    """Tudui.forward: x (N, 3, H, W) -> Conv2d(3,6,k=3,s=1,p=0) -> (N, 6, H-2, W-2)."""
    N, C, H, W = x_nchw.shape
    O = w_ochw.shape[0]
    OH, OW = H - KH + 1, W - KW + 1
    HW = H * W
    NHW = N * HW
    max_shift = (KH - 1) * W + (KW - 1)

    # --- XLA-side im2col (fuses with the existing pad/reshape glue) ---------
    x_flat = x_nchw.reshape(N, C, HW)
    x_pad = jnp.pad(x_flat, ((0, 0), (0, 0), (0, max_shift)))   # keep tap shifts in bounds
    rows = []
    for c in range(C):
        for kh in range(KH):
            for kw in range(KW):
                shift = kh * W + kw
                rows.append(x_pad[:, c, shift:shift + HW])       # (N, HW)
    patches = jnp.stack(rows, axis=0).reshape(K_TAPS, NHW)       # row = c*9 + kh*3 + kw
    patches = jnp.pad(patches, ((0, KP - K_TAPS), (0, 0)))       # (KP, NHW)

    w_mat = jnp.pad(w_ochw.reshape(O, K_TAPS),
                    ((0, OP - O), (0, KP - K_TAPS)))             # (OP, KP), same col order
    b_col = jnp.pad(b_o.reshape(O, 1), ((0, OP - O), (0, 0)))    # (OP, 1)

    cost = pl.CostEstimate(
        flops=2 * OP * KP * NHW,
        transcendentals=0,
        bytes_accessed=4 * (KP * NHW + OP * KP + OP + OP * NHW))

    out = pl.pallas_call(
        _conv_matmul_kernel,
        out_shape=jax.ShapeDtypeStruct((OP, NHW), x_nchw.dtype),
        grid=(1,),                               # single step: whole batch in one block
        in_specs=[
            pl.BlockSpec((KP, NHW), lambda i: (0, 0)),
            pl.BlockSpec((OP, KP), lambda i: (0, 0)),
            pl.BlockSpec((OP, 1), lambda i: (0, 0)),
        ],
        out_specs=pl.BlockSpec((OP, NHW), lambda i: (0, 0)),
        compiler_params=pltpu.CompilerParams(
            dimension_semantics=("arbitrary",)),
        cost_estimate=cost,
    )(patches, w_mat, b_col)

    # XLA-side glue: drop channel padding, unfold lanes -> NCHW, crop valid window.
    out = out[:O].reshape(O, N, H, W).transpose(1, 0, 2, 3)
    return out[:, :, :OH, :OW]


if __name__ == "__main__":
    key = jax.random.PRNGKey(0)
    kx, kw_key, kb_key = jax.random.split(key, 3)

    N, H, W = 2, 16, 16
    x = jax.random.normal(kx, (N, IN_C, H, W), dtype=jnp.float32)

    # Deterministic parameter init matching Conv2d(3, 6, 3) shapes
    # (PyTorch default: U(-1/sqrt(fan_in), 1/sqrt(fan_in))).
    fan_in = IN_C * KH * KW
    bound = 1.0 / (fan_in ** 0.5)
    w = jax.random.uniform(kw_key, (OUT_C, IN_C, KH, KW), jnp.float32, -bound, bound)
    b = jax.random.uniform(kb_key, (OUT_C,), jnp.float32, -bound, bound)

    out = jax.block_until_ready(tudui_forward(x, w, b))
    assert out.shape == (N, OUT_C, H - 2, W - 2), out.shape

    # Sanity check against XLA's conv (same NCHW / OIHW / valid-padding semantics).
    ref = jax.lax.conv_general_dilated(
        x, w, window_strides=(1, 1), padding="VALID",
        dimension_numbers=("NCHW", "OIHW", "NCHW")) + b.reshape(1, OUT_C, 1, 1)
    assert jnp.allclose(out, ref, atol=1e-5, rtol=1e-5), float(jnp.max(jnp.abs(out - ref)))

    print("KERNEL_OK")
</pallas_src>

<mosaic_0001>
module attributes {stable_mosaic.version = 11 : i64} {
  func.func @_conv_matmul_kernel(%arg0: i32, %arg1: memref<32x512xf32, #tpu.memory_space<vmem>>, %arg2: memref<8x32xf32, #tpu.memory_space<vmem>>, %arg3: memref<8x1xf32, #tpu.memory_space<vmem>>, %arg4: memref<8x512xf32, #tpu.memory_space<vmem>>) attributes {dimension_semantics = [#tpu.dimension_semantics<arbitrary>], iteration_bounds = array<i64: 1>, scalar_prefetch = 0 : i64, scratch_operands = 0 : i64, tpu.core_type = #tpu.core_type<tc>, window_params = [{pipeline_mode = #tpu.pipeline_mode<synchronous>, transform_indices = @transform_0, window_bounds = array<i64: 32, 512>}, {pipeline_mode = #tpu.pipeline_mode<synchronous>, transform_indices = @transform_1, window_bounds = array<i64: 8, 32>}, {pipeline_mode = #tpu.pipeline_mode<synchronous>, transform_indices = @transform_2, window_bounds = array<i64: 8, 1>}, {pipeline_mode = #tpu.pipeline_mode<synchronous>, transform_indices = @transform_3, window_bounds = array<i64: 8, 512>}]} {
    %c0 = arith.constant 0 : index
    %c0_0 = arith.constant 0 : index
    %0 = vector.load %arg2[%c0, %c0_0] : memref<8x32xf32, #tpu.memory_space<vmem>>, vector<8x32xf32>
    %c0_1 = arith.constant 0 : index
    %c0_2 = arith.constant 0 : index
    %1 = vector.load %arg1[%c0_1, %c0_2] : memref<32x512xf32, #tpu.memory_space<vmem>>, vector<32x512xf32>
    %cst = arith.constant dense<0.000000e+00> : vector<8x512xf32>
    %2 = tpu.matmul %0, %1, %cst {dimension_numbers = #tpu.dot_dimension_numbers<[1], [0], [0], [1], [0, 0, 1, 1], [], []>} : vector<8x32xf32>, vector<32x512xf32>, vector<8x512xf32> -> vector<8x512xf32>
    %c0_3 = arith.constant 0 : index
    %c0_4 = arith.constant 0 : index
    %3 = vector.load %arg3[%c0_3, %c0_4] : memref<8x1xf32, #tpu.memory_space<vmem>>, vector<8x1xf32>
    %4 = vector.shape_cast %3 : vector<8x1xf32> to vector<8x1xf32>
    %5 = vector.broadcast %4 : vector<8x1xf32> to vector<8x512xf32>
    %6 = arith.addf %2, %5 : vector<8x512xf32>
    %c0_5 = arith.constant 0 : index
    %c0_6 = arith.constant 0 : index
    %7 = vector.load %arg4[%c0_5, %c0_6] : memref<8x512xf32, #tpu.memory_space<vmem>>, vector<8x512xf32>
    tpu.vector_store %arg4[%c0_5, %c0_6], %6 {strides = array<i32>} : memref<8x512xf32, #tpu.memory_space<vmem>>, vector<8x512xf32>,
    return
  }
  func.func @transform_0(%arg0: i32) -> (i32, i32) {
    %c0_i32 = arith.constant 0 : i32
    %c0_i32_0 = arith.constant 0 : i32
    %c0_i32_1 = arith.constant 0 : i32
    return %c0_i32, %c0_i32_0 : i32, i32
  }
  func.func @transform_1(%arg0: i32) -> (i32, i32) {
    %c0_i32 = arith.constant 0 : i32
    %c0_i32_0 = arith.constant 0 : i32
    %c0_i32_1 = arith.constant 0 : i32
    return %c0_i32, %c0_i32_0 : i32, i32
  }
  func.func @transform_2(%arg0: i32) -> (i32, i32) {
    %c0_i32 = arith.constant 0 : i32
    %c0_i32_0 = arith.constant 0 : i32
    %c0_i32_1 = arith.constant 0 : i32
    return %c0_i32, %c0_i32_0 : i32, i32
  }
  func.func @transform_3(%arg0: i32) -> (i32, i32) {
    %c0_i32 = arith.constant 0 : i32
    %c0_i32_0 = arith.constant 0 : i32
    %c0_i32_1 = arith.constant 0 : i32
    return %c0_i32, %c0_i32_0 : i32, i32
  }
}

</mosaic_0001>

<llo_original>
// kernel: tudui_forward.1
$region0: #{tudui_forward.1}
  #allocation0 [shape = 'u32[]', space=smem, size = 0x4, offset = 0x4, fixed_abs, tag = 'smem constant byte address 0x4 - core index']
  #allocation1 [shape = 'u32[144,128]{1,0:T(1,128)}', space=vmem, size = 0x12000, scoped, tag = 'internal scratch']
  %s0 = inlined_call_operand.vmem [shape: f32[32,512], index: 0, kind: input, shape index: {}]
  %s1 = inlined_call_operand.vmem [shape: f32[8,32], index: 1, kind: input, shape index: {}]
  %s2 = inlined_call_operand.vmem [shape: f32[8,1], index: 2, kind: input, shape index: {}]
  %s3 = inlined_call_operand.vmem [shape: f32[8,512], index: 3, kind: output, shape index: {}]
  %s4 = sld [smem:[#allocation0]]
  $region22: #{tudui_forward.1} parent=0
    _
  %s6 = ssub.s32 1, %s4
  %s7 = scalar_select 0, %s6, %s4
  // Predicated region
  $region2: #{tudui_forward.1} parent=0 // pred_check
    _
  $region3: #{tudui_forward.1} parent=0 // pred_check_branch
    %9 = sbr.rel (0) target = $region5
  $region4: #{tudui_forward.1} parent=0 // pred_region
    _
  $region5: #{tudui_forward.1} parent=0 // pred_fallthru
    _
  // Predicated region
  $region6: #{tudui_forward.1} parent=0 // pred_check
    _
  $region7: #{tudui_forward.1} parent=0 // pred_check_branch
    %11 = sbr.rel (0) target = $region9
  $region8: #{tudui_forward.1} parent=0 // pred_region
    _
  $region9: #{tudui_forward.1} parent=0 // pred_fallthru
    _
  // Predicated region
  $region10: #{tudui_forward.1} parent=0 // pred_check
    _
  $region11: #{tudui_forward.1} parent=0 // pred_check_branch
    %13 = sbr.rel (0) target = $region13
  $region12: #{tudui_forward.1} parent=0 // pred_region
    _
  $region13: #{tudui_forward.1} parent=0 // pred_fallthru
    _
  %v14 = vld [vmem:[%s1] sm:$0xff]
  %v15 = vld [vmem:[%s0] sm:$0xff]
  %v16 = vld [vmem:[%s0 + $0x8] sm:$0xff]
  %v17 = vld [vmem:[%s0 + $0x10] sm:$0xff]
  %v18 = vld [vmem:[%s0 + $0x18] sm:$0xff]
  %v19 = vld [vmem:[%s0 + $0x20] sm:$0xff]
  %v20 = vld [vmem:[%s0 + $0x28] sm:$0xff]
  %v21 = vld [vmem:[%s0 + $0x30] sm:$0xff]
  %v22 = vld [vmem:[%s0 + $0x38] sm:$0xff]
  %v23 = vld [vmem:[%s0 + $0x40] sm:$0xff]
  %v24 = vld [vmem:[%s0 + $0x48] sm:$0xff]
  %v25 = vld [vmem:[%s0 + $0x50] sm:$0xff]
  %v26 = vld [vmem:[%s0 + $0x58] sm:$0xff]
  %v27 = vld [vmem:[%s0 + $0x60] sm:$0xff]
  %v28 = vld [vmem:[%s0 + $0x68] sm:$0xff]
  %v29 = vld [vmem:[%s0 + $0x70] sm:$0xff]
  %v30 = vld [vmem:[%s0 + $0x78] sm:$0xff]
  %v31 = vld [vmem:[%s2] sm:$0xff]
  %33 = vset.pattern.permute.xlu0 0
  %34 = vperm.xlu0 %33, %v31
  %v35 = vpop.permute.xlu0 %34
  %vm37 = vcmask 261120
  %v39 = vsel %vm37, %v14, 0
  %41 = vmatprep.subr.mxu0 0.0
  %42 = vmatpush1.msra.mxu0 0.0
  %43 = vmatprep.subr.mxu0 0.0
  %44 = vmatpush1.msra.mxu0 0.0
  %45 = vmatprep.subr.mxu0 0.0
  %46 = vmatpush1.msra.mxu0 0.0
  %47 = vmatprep.subr.mxu0 0.0
  %48 = vmatpush1.msra.mxu0 0.0
  %49 = vmatprep.subr.mxu0 0.0
  %50 = vmatpush1.msra.mxu0 0.0
  %51 = vmatprep.subr.mxu0 0.0
  %52 = vmatpush1.msra.mxu0 0.0
  %53 = vmatprep.subr.mxu0 0.0
  %54 = vmatpush1.msra.mxu0 0.0
  %55 = vmatprep.subr.mxu0 0.0
  %56 = vmatpush1.msra.mxu0 0.0
  %57 = vmatprep.subr.mxu0 0.0
  %58 = vmatpush1.msra.mxu0 0.0
  %59 = vmatprep.subr.mxu0 0.0
  %60 = vmatpush1.msra.mxu0 0.0
  %61 = vmatprep.subr.mxu0 0.0
  %62 = vmatpush1.msra.mxu0 0.0
  %63 = vmatprep.subr.mxu0 0.0
  %64 = vmatpush1.msra.mxu0 0.0
  %65 = vmatprep.subr.mxu0 %v28
  %66 = vmatpush1.msra.mxu0 %v27
  %67 = vmatprep.subr.mxu0 %v24
  %68 = vmatpush1.msra.mxu0 %v23
  %69 = vmatprep.subr.mxu0 %v20
  %70 = vmatpush1.msra.mxu0 %v19
  %71 = vmatprep.subr.mxu0 %v16
  %72 = vmatpush1.msra.mxu0 %v15
  %73 = vmatprep.subr.mxu0 0.0
  %74 = vmatpush2.msra.mxu0 0.0
  %75 = vmatprep.subr.mxu0 0.0
  %76 = vmatpush2.msra.mxu0 0.0
  %77 = vmatprep.subr.mxu0 0.0
  %78 = vmatpush2.msra.mxu0 0.0
  %79 = vmatprep.subr.mxu0 0.0
  %80 = vmatpush2.msra.mxu0 0.0
  %81 = vmatprep.subr.mxu0 0.0
  %82 = vmatpush2.msra.mxu0 0.0
  %83 = vmatprep.subr.mxu0 0.0
  %84 = vmatpush2.msra.mxu0 0.0
  %85 = vmatprep.subr.mxu0 0.0
  %86 = vmatpush2.msra.mxu0 0.0
  %87 = vmatprep.subr.mxu0 0.0
  %88 = vmatpush2.msra.mxu0 0.0
  %89 = vmatprep.subr.mxu0 0.0
  %90 = vmatpush2.msra.mxu0 0.0
  %91 = vmatprep.subr.mxu0 0.0
  %92 = vmatpush2.msra.mxu0 0.0
  %93 = vmatprep.subr.mxu0 0.0
  %94 = vmatpush2.msra.mxu0 0.0
  %95 = vmatprep.subr.mxu0 0.0
  %96 = vmatpush2.msra.mxu0 0.0
  %97 = vmatprep.subr.mxu0 0.0
  %98 = vmatpush2.msra.mxu0 0.0
  %99 = vmatprep.subr.mxu0 0.0
  %100 = vmatpush2.msra.mxu0 0.0
  %101 = vmatprep.subr.mxu0 0.0
  %102 = vmatpush2.msra.mxu0 0.0
  %103 = vmatprep.subr.mxu0 0.0
  %104 = vmatpush2.msra.mxu0 0.0
  %105 = vmatprep.mubr.f32.mxu0 0.0
  %106 = vmatmul.mubr.f32.gmra.mxu0 %v39
  %v107 = vpop.f32.mrf.mxu0
  %v108 = vadd.f32 %v35, %v107
  %v109 = vpop.f32.mrf.mxu0
  %v110 = vadd.f32 %v35, %v109
  %111 = vdwg.mxu0
  %112 = vmatprep.subr.mxu0 0.0
  %113 = vmatpush1.msra.mxu0 0.0
  %114 = vmatprep.subr.mxu0 0.0
  %115 = vmatpush1.msra.mxu0 0.0
  %116 = vmatprep.subr.mxu0 0.0
  %117 = vmatpush1.msra.mxu0 0.0
  %118 = vmatprep.subr.mxu0 0.0
  %119 = vmatpush1.msra.mxu0 0.0
  %120 = vmatprep.subr.mxu0 0.0
  %121 = vmatpush1.msra.mxu0 0.0
  %122 = vmatprep.subr.mxu0 0.0
  %123 = vmatpush1.msra.mxu0 0.0
  %124 = vmatprep.subr.mxu0 0.0
  %125 = vmatpush1.msra.mxu0 0.0
  %126 = vmatprep.subr.mxu0 0.0
  %127 = vmatpush1.msra.mxu0 0.0
  %128 = vmatprep.subr.mxu0 0.0
  %129 = vmatpush1.msra.mxu0 0.0
  %130 = vmatprep.subr.mxu0 0.0
  %131 = vmatpush1.msra.mxu0 0.0
  %132 = vmatprep.subr.mxu0 0.0
  %133 = vmatpush1.msra.mxu0 0.0
  %134 = vmatprep.subr.mxu0 0.0
  %135 = vmatpush1.msra.mxu0 0.0
  %136 = vmatprep.subr.mxu0 %v30
  %137 = vmatpush1.msra.mxu0 %v29
  %138 = vmatprep.subr.mxu0 %v26
  %139 = vmatpush1.msra.mxu0 %v25
  %140 = vmatprep.subr.mxu0 %v22
  %141 = vmatpush1.msra.mxu0 %v21
  %142 = vmatprep.subr.mxu0 %v18
  %143 = vmatpush1.msra.mxu0 %v17
  %144 = vmatprep.subr.mxu0 0.0
  %145 = vmatpush2.msra.mxu0 0.0
  %146 = vmatprep.subr.mxu0 0.0
  %147 = vmatpush2.msra.mxu0 0.0
  %148 = vmatprep.subr.mxu0 0.0
  %149 = vmatpush2.msra.mxu0 0.0
  %150 = vmatprep.subr.mxu0 0.0
  %151 = vmatpush2.msra.mxu0 0.0
  %152 = vmatprep.subr.mxu0 0.0
  %153 = vmatpush2.msra.mxu0 0.0
  %154 = vmatprep.subr.mxu0 0.0
  %155 = vmatpush2.msra.mxu0 0.0
  %156 = vmatprep.subr.mxu0 0.0
  %157 = vmatpush2.msra.mxu0 0.0
  %158 = vmatprep.subr.mxu0 0.0
  %159 = vmatpush2.msra.mxu0 0.0
  %160 = vmatprep.subr.mxu0 0.0
  %161 = vmatpush2.msra.mxu0 0.0
  %162 = vmatprep.subr.mxu0 0.0
  %163 = vmatpush2.msra.mxu0 0.0
  %164 = vmatprep.subr.mxu0 0.0
  %165 = vmatpush2.msra.mxu0 0.0
  %166 = vmatprep.subr.mxu0 0.0
  %167 = vmatpush2.msra.mxu0 0.0
  %168 = vmatprep.subr.mxu0 0.0
  %169 = vmatpush2.msra.mxu0 0.0
  %170 = vmatprep.subr.mxu0 0.0
  %171 = vmatpush2.msra.mxu0 0.0
  %172 = vmatprep.subr.mxu0 0.0
  %173 = vmatpush2.msra.mxu0 0.0
  %174 = vmatprep.subr.mxu0 0.0
  %175 = vmatpush2.msra.mxu0 0.0
  %176 = vmatprep.mubr.f32.mxu0 0.0
  %177 = vmatmul.mubr.f32.gmra.mxu0 %v39
  %v178 = vpop.f32.mrf.mxu0
  %v179 = vadd.f32 %v35, %v178
  %v180 = vpop.f32.mrf.mxu0
  %v181 = vadd.f32 %v35, %v180
  %182 = vdwg.mxu0
  %183 = vst [vmem:[%s3] sm:$0xff] %v108
  %184 = vst [vmem:[%s3 + $0x8] sm:$0xff] %v110
  %185 = vst [vmem:[%s3 + $0x10] sm:$0xff] %v179
  %186 = vst [vmem:[%s3 + $0x18] sm:$0xff] %v181
  // Predicated region
  $region14: #{tudui_forward.1} parent=0 // pred_check
    _
  $region15: #{tudui_forward.1} parent=0 // pred_check_branch
    %188 = sbr.rel (0) target = $region17
  $region16: #{tudui_forward.1} parent=0 // pred_region
    _
  $region17: #{tudui_forward.1} parent=0 // pred_fallthru
    _
  // Predicated region
  $region18: #{tudui_forward.1} parent=0 // pred_check
    _
  $region19: #{tudui_forward.1} parent=0 // pred_check_branch
    %190 = sbr.rel (0) target = $region21
  $region20: #{tudui_forward.1} parent=0 // pred_region
    _
  $region21: #{tudui_forward.1} parent=0 // pred_fallthru
    _

</llo_original>
